<compile_context>
chip_gen: v7x
topology: tpu7x:2x2x1
jax: 0.10.0
libtpu: 0.0.40
codegen_flags: <defaults>
</compile_context>

<pallas_src>
import jax
import jax.numpy as jnp
from jax.experimental import pallas as pl
from jax.experimental.pallas import tpu as pltpu


def _noop_kernel(x_ref, o_ref):
    # Output aliases the input (input_output_aliases={0: 0}) and the export-mode
    # quant op is identity on x, so there is nothing to do: zero data movement.
    del x_ref, o_ref  # intentionally untouched


def _dma_copy_kernel(x_hbm, o_hbm, sem):
    # Single HBM->HBM DMA of the whole array: no VMEM staging, no tile-shape
    # requirements, works for any rank / shape / dtype.
    cp = pltpu.make_async_copy(x_hbm, o_hbm, sem)
    cp.start()
    cp.wait()


def _identity_passthrough(x):
    """Zero-copy pass-through: output aliases the (donated) input buffer."""
    return pl.pallas_call(
        _noop_kernel,
        out_shape=jax.ShapeDtypeStruct(x.shape, x.dtype),
        in_specs=[pl.BlockSpec(memory_space=pl.ANY)],
        out_specs=pl.BlockSpec(memory_space=pl.ANY),
        input_output_aliases={0: 0},
        cost_estimate=pl.CostEstimate(flops=0, transcendentals=0,
                                      bytes_accessed=0),
    )(x)


def _identity_copy(x):
    """Non-donating pass-through: one grid-less HBM->HBM DMA (2*nbytes traffic)."""
    nbytes = x.size * x.dtype.itemsize
    return pl.pallas_call(
        _dma_copy_kernel,
        out_shape=jax.ShapeDtypeStruct(x.shape, x.dtype),
        in_specs=[pl.BlockSpec(memory_space=pl.ANY)],
        out_specs=pl.BlockSpec(memory_space=pl.ANY),
        scratch_shapes=[pltpu.SemaphoreType.DMA(())],
        cost_estimate=pl.CostEstimate(flops=0, transcendentals=0,
                                      bytes_accessed=2 * nbytes),
    )(x)


class ExportQuantActPallas:
    """JAX/Pallas mirror of ExportQuantAct (export_mode forward).

    NOTE on aliasing: with donate_input=True (default) the output aliases the
    input buffer (input_output_aliases={0: 0}).  Inside jit, XLA inserts a copy
    automatically if x is still live afterwards; eager / top-level callers must
    not reuse `x` after the call.  Pass donate_input=False to get a fresh output
    buffer via a single HBM->HBM DMA instead.
    """

    def __init__(self, act_scaling_factor=0.05, activation_bit=8,
                 full_precision_flag=False, quant_mode="symmetric",
                 donate_input=True):
        self.export_mode = True
        self.donate_input = donate_input
        self.scale = jnp.asarray(act_scaling_factor, dtype=jnp.float32)
        self.zero_point = jnp.asarray(0, dtype=jnp.int32)
        self.bit_width = jnp.asarray(
            32 if full_precision_flag else activation_bit, dtype=jnp.int32)
        self.narrow_range = 0
        self.rounding_mode = "ROUND"
        self.signed = 1 if quant_mode == "symmetric" else 0

    def __call__(self, x, act_scaling_factor=None, weight_scaling_factor=None):
        if not self.export_mode:
            # Mirrors the PyTorch module: non-export branch returns bare x
            # (different arity from the export branch, as in the original).
            return x
        # Both the bit_width == 1 branch (BinaryQuantFunc) and the general
        # QuantFunc branch are identity on x in the forward pass.
        # TODO(synk): the integer round/clamp/dequant of the Quant node is never
        # executed by the PyTorch forward (ONNX symbolic only), so it is
        # intentionally not emulated here.
        if x.size == 0:
            y = x
        elif self.donate_input:
            y = _identity_passthrough(x)
        else:
            y = _identity_copy(x)
        # Mirrors PyTorch: the second element is the act_scaling_factor that was
        # passed in (possibly None), not self.scale.
        return (y, act_scaling_factor)


if __name__ == "__main__":
    key = jax.random.PRNGKey(0)
    shape = (2, 4, 16, 16)          # NCHW activation, as the PyTorch module sees it
    x = jax.random.normal(key, shape, dtype=jnp.float32)
    act_sf = jnp.asarray(0.05, dtype=jnp.float32)
    # Reference regenerated from the same PRNG key so we never rely on `x`
    # after the donating call.
    expected = jax.random.normal(jax.random.PRNGKey(0), shape, dtype=jnp.float32)

    # 1) Non-donating path first (fresh output via one HBM->HBM DMA): x stays valid.
    layer_copy = ExportQuantActPallas(act_scaling_factor=0.05, activation_bit=8,
                                      full_precision_flag=False,
                                      quant_mode="symmetric", donate_input=False)
    y_copy, sf_out = layer_copy(x, act_scaling_factor=act_sf)
    y_copy = jax.block_until_ready(y_copy)
    assert y_copy.shape == shape and y_copy.dtype == jnp.float32
    assert bool(jnp.array_equal(y_copy, expected)), "copy path must be exact pass-through"
    assert sf_out is act_sf

    # 2) Default zero-copy donating path last: do not reuse x afterwards.
    layer = ExportQuantActPallas(act_scaling_factor=0.05, activation_bit=8,
                                 full_precision_flag=False,
                                 quant_mode="symmetric")
    y, sf_out2 = layer(x, act_scaling_factor=act_sf)
    y = jax.block_until_ready(y)
    assert y.shape == shape and y.dtype == jnp.float32
    assert bool(jnp.array_equal(y, expected)), "zero-copy path must be exact pass-through"
    assert sf_out2 is act_sf

    print("KERNEL_OK")
</pallas_src>

<mosaic_0001>
module attributes {stable_mosaic.version = 11 : i64} {
  func.func @_dma_copy_kernel(%arg0: memref<2x4x16x16xf32, #tpu.memory_space<any>>, %arg1: memref<2x4x16x16xf32, #tpu.memory_space<any>>, %arg2: memref<!tpu.dma_semaphore, #tpu.memory_space<semaphore_mem>>) attributes {dimension_semantics = [], scalar_prefetch = 0 : i64, scratch_operands = 1 : i64, tpu.core_type = #tpu.core_type<tc>} {
    tpu.enqueue_dma source(%arg0 : memref<2x4x16x16xf32, #tpu.memory_space<any>>) target(%arg1 : memref<2x4x16x16xf32, #tpu.memory_space<any>>) target_semaphore(%arg2 : memref<!tpu.dma_semaphore, #tpu.memory_space<semaphore_mem>>)
    tpu.wait_dma2 semaphore(%arg2 : memref<!tpu.dma_semaphore, #tpu.memory_space<semaphore_mem>>) src(%arg0 : memref<2x4x16x16xf32, #tpu.memory_space<any>>) dst(%arg1 : memref<2x4x16x16xf32, #tpu.memory_space<any>>)
    return
  }
}

</mosaic_0001>

<llo_original>
// kernel: tpu_custom_call.1
$region0: #{tpu_custom_call.1}
  #allocation0 [shape = 'u32[]', space=smem, size = 0x4, offset = 0x4, fixed_abs, tag = 'smem constant byte address 0x4 - core index']
  #allocation1 [shape = 'u32[144,128]{1,0:T(1,128)}', space=vmem, size = 0x12000, scoped, tag = 'internal scratch']
  #allocation2 [shape = 's32[1]{0}', space=sflag, size = 0x4, scoped, tag = 'scratch operand']
  #allocation3 [shape = 's32[]', space=sflag, size = 0x4, offset = 0, fixed_abs, tag = 'sflag constant byte address 0x0 - dummy sync flag']
  #allocation4 [shape = 'u32[0]{0}', space=smem, size = 0, offset = 0, fixed_abs, tag = 'smem constant byte address 0x0 - null']
  %s0 = inlined_call_operand.hbm [shape: f32[2,4,16,16], index: 0, kind: input, shape index: {}]
  %s1 = inlined_call_operand.hbm [shape: f32[2,4,16,16], index: 1, kind: output, shape index: {}]
  %s2 = sld [smem:[#allocation0]]
  $region2: #{tpu_custom_call.1} parent=0
    _
  %s4 = ssub.s32 1, %s2
  %s5 = scalar_select 0, %s4, %s2
  %s7 = sshll.u32 1, 14
  %s8 = sxor.u32 4294967295, %s7
  %s11 = sshll.u32 3, 24
  %s12 = sxor.u32 4294967295, %s11
  %s13 = sand.u32 0, %s12
  %s15 = sor.u32 %s13, 0
  %18 = dma.general %s0, 2048, %s1, [#allocation2], [#allocation3], [#allocation4], %s15, 0
  %s19 = smul.u32 2, 4
  %s20 = smul.u32 %s19, 16
  %s21 = smul.u32 %s20, 1
  %s22 = sshll.u32 %s21, 4
  %23 = dma.done [#allocation2], %s22
  %24 = vsyncmov [#allocation2]
  %s25 = vpop.sfrf %24
  %p26 = scmp.eq.s32.totalorder %s25, 0
  %p27 = pneg %p26
  %29 = shalt.err (%p27)

</llo_original>
